<compile_context>
chip_gen: v6e
topology: v6e:2x2x1
jax: 0.10.0
libtpu: 0.0.40
codegen_flags: <defaults>
</compile_context>

<pallas_src>
import functools

import jax
import jax.numpy as jnp
from jax.experimental import pallas as pl
from jax.experimental.pallas import tpu as pltpu


# ---------------------------------------------------------------------------
# Kernel
# ---------------------------------------------------------------------------
def _actor_ppo_fwd_kernel(x_ref,
                          w0_ref, b0_ref,
                          w1_ref, b1_ref,
                          w2_ref, b2_ref,
                          w3_ref, b3_ref,
                          out_ref):
    # x_ref is f32 (cast to bf16 here, avoids a wrapper-side cast pass);
    # w*_ref are bf16; b*_ref are f32; out_ref is bf16.
    x = x_ref[...].astype(jnp.bfloat16)

    # Layer 0: Linear -> ReLU
    h = jnp.dot(x, w0_ref[...], preferred_element_type=jnp.float32) + b0_ref[...]
    h = jnp.maximum(h, 0.0)

    # Layer 1: Linear -> ReLU
    h = jnp.dot(h.astype(jnp.bfloat16), w1_ref[...],
                preferred_element_type=jnp.float32) + b1_ref[...]
    h = jnp.maximum(h, 0.0)

    # Layer 2: Linear -> Hardswish   (x * relu6(x + 3) / 6, f32 on the VPU)
    h = jnp.dot(h.astype(jnp.bfloat16), w2_ref[...],
                preferred_element_type=jnp.float32) + b2_ref[...]
    h = h * jnp.clip(h + 3.0, 0.0, 6.0) * (1.0 / 6.0)

    # Layer 3: Linear -> tanh, store bf16 (halves output HBM/vst traffic)
    a = jnp.dot(h.astype(jnp.bfloat16), w3_ref[...],
                preferred_element_type=jnp.float32) + b3_ref[...]
    out_ref[...] = jnp.tanh(a).astype(out_ref.dtype)


# ---------------------------------------------------------------------------
# Wrapper helpers
# ---------------------------------------------------------------------------
def _round_up(a: int, m: int) -> int:
    return ((a + m - 1) // m) * m


def _choose_tile(rows: int, tile_b: int) -> int:
    """Batch-row tile: multiple of 16 (bf16 sublanes), prefer multiples of 256,
    and for large row counts keep at least 2 tiles so the parallel batch axis
    can shard across both TensorCores on v7x (no-op on v5e/v6e)."""
    tile_b = max(256, (int(tile_b) // 256) * 256)
    if rows <= 512:
        return min(_round_up(max(rows, 1), 16), tile_b)
    half = max(256, (pl.cdiv(rows, 2) // 256) * 256)
    return min(tile_b, half)


def _block_diag(w, groups: int):
    """[fin, fout] -> block-diagonal [groups*fin, groups*fout]."""
    fin, fout = w.shape
    wb = jnp.zeros((groups * fin, groups * fout), w.dtype)
    for g in range(groups):
        wb = wb.at[g * fin:(g + 1) * fin, g * fout:(g + 1) * fout].set(w)
    return wb


# ---------------------------------------------------------------------------
# Wrapper
# ---------------------------------------------------------------------------
@functools.partial(jax.jit, static_argnames=("tile_b",))
def actor_ppo_forward(x, params, *, tile_b: int = 4096):
    """x: [B, state_dim] f32. params: dict of [in, out] weights, [1, out] biases.
    Returns [B, action_dim] bf16 (tanh output)."""
    B, state_dim = x.shape
    mid_dim = params["w0"].shape[1]
    action_dim = params["w3"].shape[1]

    # Lane-pack G independent batch rows when the feature width is small
    # (otherwise the MXU runs nearly empty and the kernel is push-cadence bound).
    groups = (128 // mid_dim) if mid_dim <= 64 else 1
    groups = max(groups, 1)

    # NOTE: in production, hoist this (cheap) weight prep out of the per-call
    # path; weights are tiny so it is negligible here.
    if groups > 1:
        Bp = _round_up(B, groups)
        if Bp != B:
            x = jnp.pad(x, ((0, Bp - B), (0, 0)))   # only when B % groups != 0
        rows = Bp // groups
        xin = x.reshape(rows, groups * state_dim)    # contiguous reshape
        w0 = _block_diag(params["w0"], groups).astype(jnp.bfloat16)
        w1 = _block_diag(params["w1"], groups).astype(jnp.bfloat16)
        w2 = _block_diag(params["w2"], groups).astype(jnp.bfloat16)
        w3 = _block_diag(params["w3"], groups).astype(jnp.bfloat16)
        b0 = jnp.tile(params["b0"], (1, groups))
        b1 = jnp.tile(params["b1"], (1, groups))
        b2 = jnp.tile(params["b2"], (1, groups))
        b3 = jnp.tile(params["b3"], (1, groups))
        in_dim, hid, out_w = groups * state_dim, groups * mid_dim, groups * action_dim
    else:
        rows = B
        xin = x
        w0 = params["w0"].astype(jnp.bfloat16)
        w1 = params["w1"].astype(jnp.bfloat16)
        w2 = params["w2"].astype(jnp.bfloat16)
        w3 = params["w3"].astype(jnp.bfloat16)
        b0, b1, b2, b3 = params["b0"], params["b1"], params["b2"], params["b3"]
        in_dim, hid, out_w = state_dim, mid_dim, action_dim

    tile = _choose_tile(rows, tile_b)
    num_tiles = pl.cdiv(rows, tile)

    in_specs = [
        # Streamed over the batch grid axis (ragged last block handled by Pallas).
        pl.BlockSpec((tile, in_dim), lambda i: (i, 0)),
        # Weights / biases: constant block index -> VMEM-resident, no re-DMA.
        pl.BlockSpec((in_dim, hid), lambda i: (0, 0)),
        pl.BlockSpec((1, hid), lambda i: (0, 0)),
        pl.BlockSpec((hid, hid), lambda i: (0, 0)),
        pl.BlockSpec((1, hid), lambda i: (0, 0)),
        pl.BlockSpec((hid, hid), lambda i: (0, 0)),
        pl.BlockSpec((1, hid), lambda i: (0, 0)),
        pl.BlockSpec((hid, out_w), lambda i: (0, 0)),
        pl.BlockSpec((1, out_w), lambda i: (0, 0)),
    ]
    out_spec = pl.BlockSpec((tile, out_w), lambda i: (i, 0))

    # Rough VMEM footprint (assume everything double-buffered); raise the
    # scoped-VMEM limit only for large-mid_dim configs, capped at v7x physical.
    vmem_est = (2 * tile * in_dim * 4
                + 2 * tile * out_w * 2
                + 2 * 2 * (in_dim * hid + 2 * hid * hid + hid * out_w)
                + 2 * 4 * (3 * hid + out_w))
    vmem_limit = min(vmem_est + (8 << 20), 64 << 20) if vmem_est > (30 << 20) else None

    out = pl.pallas_call(
        _actor_ppo_fwd_kernel,
        out_shape=jax.ShapeDtypeStruct((rows, out_w), jnp.bfloat16),
        grid=(num_tiles,),
        in_specs=in_specs,
        out_specs=out_spec,
        compiler_params=pltpu.CompilerParams(
            dimension_semantics=("parallel",),
            vmem_limit_bytes=vmem_limit,
        ),
    )(xin, w0, b0, w1, b1, w2, b2, w3, b3)

    if groups > 1:
        out = out.reshape(rows * groups, action_dim)
        if rows * groups != B:
            out = out[:B]
    return out


# ---------------------------------------------------------------------------
# Synthetic params + pure-JAX reference
# ---------------------------------------------------------------------------
def init_params(key, state_dim, action_dim, mid_dim):
    """Synthetic init matching ActorPPO shapes; final layer uses small weights
    (std=0.1) and 1e-6 bias, mirroring layer_norm(self.net[-1], std=0.1)."""
    ks = jax.random.split(key, 4)

    def lin(k, fan_in, fan_out, std=None, bias_const=0.0):
        scale = std if std is not None else (1.0 / jnp.sqrt(fan_in))
        w = jax.random.normal(k, (fan_in, fan_out), jnp.float32) * scale
        b = jnp.full((1, fan_out), bias_const, jnp.float32)
        return w, b

    w0, b0 = lin(ks[0], state_dim, mid_dim)
    w1, b1 = lin(ks[1], mid_dim, mid_dim)
    w2, b2 = lin(ks[2], mid_dim, mid_dim)
    w3, b3 = lin(ks[3], mid_dim, action_dim, std=0.1, bias_const=1e-6)
    return {"w0": w0, "b0": b0, "w1": w1, "b1": b1,
            "w2": w2, "b2": b2, "w3": w3, "b3": b3}


def actor_ppo_forward_ref(x, p):
    """Pure-JAX f32 reference of ActorPPO.forward."""
    h = jnp.maximum(x @ p["w0"] + p["b0"], 0.0)
    h = jnp.maximum(h @ p["w1"] + p["b1"], 0.0)
    h = h @ p["w2"] + p["b2"]
    h = h * jnp.clip(h + 3.0, 0.0, 6.0) / 6.0          # Hardswish
    return jnp.tanh(h @ p["w3"] + p["b3"])


# ---------------------------------------------------------------------------
# Test
# ---------------------------------------------------------------------------
if __name__ == "__main__":
    key = jax.random.PRNGKey(0)
    k_p1, k_p2, k_x1, k_x2, k_x3 = jax.random.split(key, 5)

    # --- Packed path: mid_dim=32 -> 4 batch rows packed into the 128-lane axis.
    state_dim, action_dim, mid_dim = 16, 4, 32
    params = init_params(k_p1, state_dim, action_dim, mid_dim)

    x_small = jax.random.normal(k_x1, (8, state_dim), jnp.float32)
    out_small = jax.block_until_ready(actor_ppo_forward(x_small, params))
    ref_small = actor_ppo_forward_ref(x_small, params)
    assert out_small.shape == (8, action_dim)
    assert jnp.allclose(out_small.astype(jnp.float32), ref_small,
                        atol=2.5e-2, rtol=2.5e-2), "small-batch mismatch vs reference"

    # Multi-row packed case (batch not a multiple of the chosen tile).
    x_big = jax.random.normal(k_x2, (200, state_dim), jnp.float32)
    out_big = jax.block_until_ready(actor_ppo_forward(x_big, params, tile_b=256))
    ref_big = actor_ppo_forward_ref(x_big, params)
    assert out_big.shape == (200, action_dim)
    assert jnp.allclose(out_big.astype(jnp.float32), ref_big,
                        atol=2.5e-2, rtol=2.5e-2), "packed multi-tile mismatch vs reference"

    # --- Generic (unpacked) path: mid_dim=128, narrow (B, action_dim) output.
    params2 = init_params(k_p2, state_dim, action_dim, 128)
    x3 = jax.random.normal(k_x3, (200, state_dim), jnp.float32)
    out3 = jax.block_until_ready(actor_ppo_forward(x3, params2))
    ref3 = actor_ppo_forward_ref(x3, params2)
    assert out3.shape == (200, action_dim)
    assert jnp.allclose(out3.astype(jnp.float32), ref3,
                        atol=2.5e-2, rtol=2.5e-2), "generic-path mismatch vs reference"

    print("KERNEL_OK")
</pallas_src>

<mosaic_0001>
module attributes {stable_mosaic.version = 11 : i64} {
  func.func @_actor_ppo_fwd_kernel(%arg0: i32, %arg1: memref<16x64xf32, #tpu.memory_space<vmem>>, %arg2: memref<64x128xbf16, #tpu.memory_space<vmem>>, %arg3: memref<1x128xf32, #tpu.memory_space<vmem>>, %arg4: memref<128x128xbf16, #tpu.memory_space<vmem>>, %arg5: memref<1x128xf32, #tpu.memory_space<vmem>>, %arg6: memref<128x128xbf16, #tpu.memory_space<vmem>>, %arg7: memref<1x128xf32, #tpu.memory_space<vmem>>, %arg8: memref<128x16xbf16, #tpu.memory_space<vmem>>, %arg9: memref<1x16xf32, #tpu.memory_space<vmem>>, %arg10: memref<16x16xbf16, #tpu.memory_space<vmem>>) attributes {dimension_semantics = [#tpu.dimension_semantics<parallel>], iteration_bounds = array<i64: 1>, scalar_prefetch = 0 : i64, scratch_operands = 0 : i64, tpu.core_type = #tpu.core_type<tc>, window_params = [{transform_indices = @transform_0, window_bounds = array<i64: 16, 64>}, {pipeline_mode = #tpu.pipeline_mode<synchronous>, transform_indices = @transform_1, window_bounds = array<i64: 64, 128>}, {pipeline_mode = #tpu.pipeline_mode<synchronous>, transform_indices = @transform_2, window_bounds = array<i64: 1, 128>}, {pipeline_mode = #tpu.pipeline_mode<synchronous>, transform_indices = @transform_3, window_bounds = array<i64: 128, 128>}, {pipeline_mode = #tpu.pipeline_mode<synchronous>, transform_indices = @transform_4, window_bounds = array<i64: 1, 128>}, {pipeline_mode = #tpu.pipeline_mode<synchronous>, transform_indices = @transform_5, window_bounds = array<i64: 128, 128>}, {pipeline_mode = #tpu.pipeline_mode<synchronous>, transform_indices = @transform_6, window_bounds = array<i64: 1, 128>}, {pipeline_mode = #tpu.pipeline_mode<synchronous>, transform_indices = @transform_7, window_bounds = array<i64: 128, 16>}, {pipeline_mode = #tpu.pipeline_mode<synchronous>, transform_indices = @transform_8, window_bounds = array<i64: 1, 16>}, {transform_indices = @transform_9, window_bounds = array<i64: 16, 16>}]} {
    %c0 = arith.constant 0 : index
    %c0_0 = arith.constant 0 : index
    %0 = vector.load %arg1[%c0, %c0_0] : memref<16x64xf32, #tpu.memory_space<vmem>>, vector<16x64xf32>
    %1 = arith.truncf %0 : vector<16x64xf32> to vector<16x64xbf16>
    %c0_1 = arith.constant 0 : index
    %c0_2 = arith.constant 0 : index
    %2 = vector.load %arg2[%c0_1, %c0_2] : memref<64x128xbf16, #tpu.memory_space<vmem>>, vector<64x128xbf16>
    %cst = arith.constant dense<0.000000e+00> : vector<16x128xf32>
    %3 = tpu.matmul %1, %2, %cst {dimension_numbers = #tpu.dot_dimension_numbers<[1], [0], [0], [1], [0, 0, 1, 1], [], []>} : vector<16x64xbf16>, vector<64x128xbf16>, vector<16x128xf32> -> vector<16x128xf32>
    %c0_3 = arith.constant 0 : index
    %c0_4 = arith.constant 0 : index
    %4 = vector.load %arg3[%c0_3, %c0_4] : memref<1x128xf32, #tpu.memory_space<vmem>>, vector<1x128xf32>
    %5 = vector.broadcast %4 : vector<1x128xf32> to vector<16x128xf32>
    %6 = arith.addf %3, %5 : vector<16x128xf32>
    %cst_5 = arith.constant 0.000000e+00 : f32
    %7 = vector.broadcast %cst_5 : f32 to vector<16x128xf32>
    %8 = arith.maximumf %6, %7 : vector<16x128xf32>
    %9 = arith.truncf %8 : vector<16x128xf32> to vector<16x128xbf16>
    %c0_6 = arith.constant 0 : index
    %c0_7 = arith.constant 0 : index
    %10 = vector.load %arg4[%c0_6, %c0_7] : memref<128x128xbf16, #tpu.memory_space<vmem>>, vector<128x128xbf16>
    %cst_8 = arith.constant dense<0.000000e+00> : vector<16x128xf32>
    %11 = tpu.matmul %9, %10, %cst_8 {dimension_numbers = #tpu.dot_dimension_numbers<[1], [0], [0], [1], [0, 0, 1, 1], [], []>} : vector<16x128xbf16>, vector<128x128xbf16>, vector<16x128xf32> -> vector<16x128xf32>
    %c0_9 = arith.constant 0 : index
    %c0_10 = arith.constant 0 : index
    %12 = vector.load %arg5[%c0_9, %c0_10] : memref<1x128xf32, #tpu.memory_space<vmem>>, vector<1x128xf32>
    %13 = vector.broadcast %12 : vector<1x128xf32> to vector<16x128xf32>
    %14 = arith.addf %11, %13 : vector<16x128xf32>
    %cst_11 = arith.constant 0.000000e+00 : f32
    %15 = vector.broadcast %cst_11 : f32 to vector<16x128xf32>
    %16 = arith.maximumf %14, %15 : vector<16x128xf32>
    %17 = arith.truncf %16 : vector<16x128xf32> to vector<16x128xbf16>
    %c0_12 = arith.constant 0 : index
    %c0_13 = arith.constant 0 : index
    %18 = vector.load %arg6[%c0_12, %c0_13] : memref<128x128xbf16, #tpu.memory_space<vmem>>, vector<128x128xbf16>
    %cst_14 = arith.constant dense<0.000000e+00> : vector<16x128xf32>
    %19 = tpu.matmul %17, %18, %cst_14 {dimension_numbers = #tpu.dot_dimension_numbers<[1], [0], [0], [1], [0, 0, 1, 1], [], []>} : vector<16x128xbf16>, vector<128x128xbf16>, vector<16x128xf32> -> vector<16x128xf32>
    %c0_15 = arith.constant 0 : index
    %c0_16 = arith.constant 0 : index
    %20 = vector.load %arg7[%c0_15, %c0_16] : memref<1x128xf32, #tpu.memory_space<vmem>>, vector<1x128xf32>
    %21 = vector.broadcast %20 : vector<1x128xf32> to vector<16x128xf32>
    %22 = arith.addf %19, %21 : vector<16x128xf32>
    %cst_17 = arith.constant 3.000000e+00 : f32
    %23 = vector.broadcast %cst_17 : f32 to vector<16x128xf32>
    %24 = arith.addf %22, %23 : vector<16x128xf32>
    %cst_18 = arith.constant 0.000000e+00 : f32
    %cst_19 = arith.constant 6.000000e+00 : f32
    %25 = vector.broadcast %cst_18 : f32 to vector<16x128xf32>
    %26 = arith.maximumf %25, %24 : vector<16x128xf32>
    %27 = vector.broadcast %cst_19 : f32 to vector<16x128xf32>
    %28 = arith.minimumf %27, %26 : vector<16x128xf32>
    %29 = arith.mulf %22, %28 : vector<16x128xf32>
    %cst_20 = arith.constant 0.166666672 : f32
    %30 = vector.broadcast %cst_20 : f32 to vector<16x128xf32>
    %31 = arith.mulf %29, %30 : vector<16x128xf32>
    %32 = arith.truncf %31 : vector<16x128xf32> to vector<16x128xbf16>
    %c0_21 = arith.constant 0 : index
    %c0_22 = arith.constant 0 : index
    %33 = vector.load %arg8[%c0_21, %c0_22] : memref<128x16xbf16, #tpu.memory_space<vmem>>, vector<128x16xbf16>
    %cst_23 = arith.constant dense<0.000000e+00> : vector<16x16xf32>
    %34 = tpu.matmul %32, %33, %cst_23 {dimension_numbers = #tpu.dot_dimension_numbers<[1], [0], [0], [1], [0, 0, 1, 1], [], []>} : vector<16x128xbf16>, vector<128x16xbf16>, vector<16x16xf32> -> vector<16x16xf32>
    %c0_24 = arith.constant 0 : index
    %c0_25 = arith.constant 0 : index
    %35 = vector.load %arg9[%c0_24, %c0_25] : memref<1x16xf32, #tpu.memory_space<vmem>>, vector<1x16xf32>
    %36 = vector.broadcast %35 : vector<1x16xf32> to vector<16x16xf32>
    %37 = arith.addf %34, %36 : vector<16x16xf32>
    %38 = math.tanh %37 : vector<16x16xf32>
    %39 = arith.truncf %38 : vector<16x16xf32> to vector<16x16xbf16>
    %c0_26 = arith.constant 0 : index
    %c0_27 = arith.constant 0 : index
    %40 = vector.load %arg10[%c0_26, %c0_27] : memref<16x16xbf16, #tpu.memory_space<vmem>>, vector<16x16xbf16>
    tpu.vector_store %arg10[%c0_26, %c0_27], %39 {strides = array<i32>} : memref<16x16xbf16, #tpu.memory_space<vmem>>, vector<16x16xbf16>,
    return
  }
  func.func @transform_0(%arg0: i32) -> (i32, i32) {
    %c0_i32 = arith.constant 0 : i32
    %c0_i32_0 = arith.constant 0 : i32
    return %arg0, %c0_i32 : i32, i32
  }
  func.func @transform_1(%arg0: i32) -> (i32, i32) {
    %c0_i32 = arith.constant 0 : i32
    %c0_i32_0 = arith.constant 0 : i32
    %c0_i32_1 = arith.constant 0 : i32
    return %c0_i32, %c0_i32_0 : i32, i32
  }
  func.func @transform_2(%arg0: i32) -> (i32, i32) {
    %c0_i32 = arith.constant 0 : i32
    %c0_i32_0 = arith.constant 0 : i32
    %c0_i32_1 = arith.constant 0 : i32
    return %c0_i32, %c0_i32_0 : i32, i32
  }
  func.func @transform_3(%arg0: i32) -> (i32, i32) {
    %c0_i32 = arith.constant 0 : i32
    %c0_i32_0 = arith.constant 0 : i32
    %c0_i32_1 = arith.constant 0 : i32
    return %c0_i32, %c0_i32_0 : i32, i32
  }
  func.func @transform_4(%arg0: i32) -> (i32, i32) {
    %c0_i32 = arith.constant 0 : i32
    %c0_i32_0 = arith.constant 0 : i32
    %c0_i32_1 = arith.constant 0 : i32
    return %c0_i32, %c0_i32_0 : i32, i32
  }
  func.func @transform_5(%arg0: i32) -> (i32, i32) {
    %c0_i32 = arith.constant 0 : i32
    %c0_i32_0 = arith.constant 0 : i32
    %c0_i32_1 = arith.constant 0 : i32
    return %c0_i32, %c0_i32_0 : i32, i32
  }
  func.func @transform_6(%arg0: i32) -> (i32, i32) {
    %c0_i32 = arith.constant 0 : i32
    %c0_i32_0 = arith.constant 0 : i32
    %c0_i32_1 = arith.constant 0 : i32
    return %c0_i32, %c0_i32_0 : i32, i32
  }
  func.func @transform_7(%arg0: i32) -> (i32, i32) {
    %c0_i32 = arith.constant 0 : i32
    %c0_i32_0 = arith.constant 0 : i32
    %c0_i32_1 = arith.constant 0 : i32
    return %c0_i32, %c0_i32_0 : i32, i32
  }
  func.func @transform_8(%arg0: i32) -> (i32, i32) {
    %c0_i32 = arith.constant 0 : i32
    %c0_i32_0 = arith.constant 0 : i32
    %c0_i32_1 = arith.constant 0 : i32
    return %c0_i32, %c0_i32_0 : i32, i32
  }
  func.func @transform_9(%arg0: i32) -> (i32, i32) {
    %c0_i32 = arith.constant 0 : i32
    %c0_i32_0 = arith.constant 0 : i32
    return %arg0, %c0_i32 : i32, i32
  }
}

</mosaic_0001>

<llo_original>
// kernel: actor_ppo_forward.1
$region0: #{actor_ppo_forward.1}
  #allocation0 [shape = 'u32[]', space=smem, size = 0x4, offset = 0x4, fixed_abs, tag = 'smem constant byte address 0x4 - core index']
  #allocation1 [shape = 'u32[144,128]{1,0:T(1,128)}', space=vmem, size = 0x12000, scoped, tag = 'internal scratch']
  %s0 = inlined_call_operand.vmem [shape: f32[2,64], index: 0, kind: input, shape index: {}]
  %s1 = inlined_call_operand.vmem [shape: bf16[64,128], index: 1, kind: input, shape index: {}]
  %s2 = inlined_call_operand.vmem [shape: f32[1,128], index: 2, kind: input, shape index: {}]
  %s3 = inlined_call_operand.vmem [shape: bf16[128,128], index: 3, kind: input, shape index: {}]
  %s4 = inlined_call_operand.vmem [shape: f32[1,128], index: 4, kind: input, shape index: {}]
  %s5 = inlined_call_operand.vmem [shape: bf16[128,128], index: 5, kind: input, shape index: {}]
  %s6 = inlined_call_operand.vmem [shape: f32[1,128], index: 6, kind: input, shape index: {}]
  %s7 = inlined_call_operand.vmem [shape: bf16[128,16], index: 7, kind: input, shape index: {}]
  %s8 = inlined_call_operand.vmem [shape: f32[1,16], index: 8, kind: input, shape index: {}]
  %s9 = inlined_call_operand.vmem [shape: bf16[2,16], index: 9, kind: output, shape index: {}]
  %s10 = sld [smem:[#allocation0]]
  $region76: #{actor_ppo_forward.1} parent=0
    _
  %s12 = ssub.s32 1, %s10
  %s13 = scalar_select 0, %s12, %s10
  $region1: #{actor_ppo_forward.1} parent=0
    #allocation2 [shape = 'u8[4096]{0}', space=vmem, size = 0x1000, scoped, tag = 'output window, operand 0, single buffered']
    // Predicated region
    $region2: #{actor_ppo_forward.1} parent=1 // pred_check
      _
    $region3: #{actor_ppo_forward.1} parent=1 // pred_check_branch
      %15 = sbr.rel (0) target = $region5
    $region4: #{actor_ppo_forward.1} parent=1 // pred_region
      _
    $region5: #{actor_ppo_forward.1} parent=1 // pred_fallthru
      _
    // Predicated region
    $region6: #{actor_ppo_forward.1} parent=1 // pred_check
      _
    $region7: #{actor_ppo_forward.1} parent=1 // pred_check_branch
      %17 = sbr.rel (0) target = $region9
    $region8: #{actor_ppo_forward.1} parent=1 // pred_region
      _
    $region9: #{actor_ppo_forward.1} parent=1 // pred_fallthru
      _
    // Predicated region
    $region10: #{actor_ppo_forward.1} parent=1 // pred_check
      _
    $region11: #{actor_ppo_forward.1} parent=1 // pred_check_branch
      %19 = sbr.rel (0) target = $region13
    $region12: #{actor_ppo_forward.1} parent=1 // pred_region
      _
    $region13: #{actor_ppo_forward.1} parent=1 // pred_fallthru
      _
    // Predicated region
    $region14: #{actor_ppo_forward.1} parent=1 // pred_check
      _
    $region15: #{actor_ppo_forward.1} parent=1 // pred_check_branch
      %21 = sbr.rel (0) target = $region17
    $region16: #{actor_ppo_forward.1} parent=1 // pred_region
      _
    $region17: #{actor_ppo_forward.1} parent=1 // pred_fallthru
      _
    // Predicated region
    $region18: #{actor_ppo_forward.1} parent=1 // pred_check
      _
    $region19: #{actor_ppo_forward.1} parent=1 // pred_check_branch
      %23 = sbr.rel (0) target = $region21
    $region20: #{actor_ppo_forward.1} parent=1 // pred_region
      _
    $region21: #{actor_ppo_forward.1} parent=1 // pred_fallthru
      _
    // Predicated region
    $region22: #{actor_ppo_forward.1} parent=1 // pred_check
      _
    $region23: #{actor_ppo_forward.1} parent=1 // pred_check_branch
      %25 = sbr.rel (0) target = $region25
    $region24: #{actor_ppo_forward.1} parent=1 // pred_region
      _
    $region25: #{actor_ppo_forward.1} parent=1 // pred_fallthru
      _
    // Predicated region
    $region26: #{actor_ppo_forward.1} parent=1 // pred_check
      _
    $region27: #{actor_ppo_forward.1} parent=1 // pred_check_branch
      %27 = sbr.rel (0) target = $region29
    $region28: #{actor_ppo_forward.1} parent=1 // pred_region
      _
    $region29: #{actor_ppo_forward.1} parent=1 // pred_fallthru
      _
    // Predicated region
    $region30: #{actor_ppo_forward.1} parent=1 // pred_check
      _
    $region31: #{actor_ppo_forward.1} parent=1 // pred_check_branch
      %29 = sbr.rel (0) target = $region33
    $region32: #{actor_ppo_forward.1} parent=1 // pred_region
      _
    $region33: #{actor_ppo_forward.1} parent=1 // pred_fallthru
      _
    // Predicated region
    $region34: #{actor_ppo_forward.1} parent=1 // pred_check
      _
    $region35: #{actor_ppo_forward.1} parent=1 // pred_check_branch
      %31 = sbr.rel (0) target = $region37
    $region36: #{actor_ppo_forward.1} parent=1 // pred_region
      _
    $region37: #{actor_ppo_forward.1} parent=1 // pred_fallthru
      _
    %v33 = vld [vmem:[%s0] sm:$0xff]
    %v34 = vld [vmem:[%s0 + $0x8] sm:$0xff]
    %v35 = vpack.c.bf16 %v34, %v33
    %v36 = vld [vmem:[%s1] sm:$0xf]
    %v37 = vld [vmem:[%s1 + $0x4] sm:$0xf]
    %v38 = vld [vmem:[%s1 + $0x8] sm:$0xf]
    %v39 = vld [vmem:[%s1 + $0xc] sm:$0xf]
    %v40 = vld [vmem:[%s1 + $0x10] sm:$0xf]
    %v41 = vld [vmem:[%s1 + $0x14] sm:$0xf]
    %v42 = vld [vmem:[%s1 + $0x18] sm:$0xf]
    %v43 = vld [vmem:[%s1 + $0x1c] sm:$0xf]
    %v44 = vld [vmem:[%s2] sm:$0x1]
    %v46 = vlaneseq
    %v47 = vshrl.u32 %v46, 7
    %v48 = vsub.s32 0, %v47
    %v49 = vrot.slane %v44, %v48
    %v59 = vunpack.c.l.b16 %v36
    %v60 = vunpack.c.l.b16 %v37
    %v61 = vunpack.c.l.b16 %v38
    %v62 = vunpack.c.l.b16 %v39
    %v63 = vunpack.c.l.b16 %v40
    %v64 = vunpack.c.l.b16 %v41
    %v65 = vunpack.c.l.b16 %v42
    %v66 = vunpack.c.l.b16 %v43
    %v67 = vpack.c.b16 %v60, %v59
    %v68 = vpack.c.b16 %v62, %v61
    %v69 = vpack.c.b16 %v64, %v63
    %v70 = vpack.c.b16 %v66, %v65
    %vm75 = vcmask 523264
    %v77 = vsel %vm75, %v35, 0
    %79 = vmatprep.subr.bf16.mxu0 0
    %80 = vmatpush1.bf16.msra.mxu0 0
    %81 = vmatprep.subr.bf16.mxu0 0
    %82 = vmatpush1.bf16.msra.mxu0 0
    %83 = vmatprep.subr.bf16.mxu0 0
    %84 = vmatpush1.bf16.msra.mxu0 0
    %85 = vmatprep.subr.bf16.mxu0 0
    %86 = vmatpush1.bf16.msra.mxu0 0
    %87 = vmatprep.subr.bf16.mxu0 0
    %88 = vmatpush1.bf16.msra.mxu0 %v70
    %89 = vmatprep.subr.bf16.mxu0 0
    %90 = vmatpush1.bf16.msra.mxu0 %v69
    %91 = vmatprep.subr.bf16.mxu0 0
    %92 = vmatpush1.bf16.msra.mxu0 %v68
    %93 = vmatprep.subr.bf16.mxu0 0
    %94 = vmatpush1.bf16.msra.mxu0 %v67
    %95 = vmatprep.subr.bf16.mxu0 0
    %96 = vmatpush2.bf16.msra.mxu0 0
    %97 = vmatprep.subr.bf16.mxu0 0
    %98 = vmatpush2.bf16.msra.mxu0 0
    %99 = vmatprep.subr.bf16.mxu0 0
    %100 = vmatpush2.bf16.msra.mxu0 0
    %101 = vmatprep.subr.bf16.mxu0 0
    %102 = vmatpush2.bf16.msra.mxu0 0
    %103 = vmatprep.subr.bf16.mxu0 0
    %104 = vmatpush2.bf16.msra.mxu0 0
    %105 = vmatprep.subr.bf16.mxu0 0
    %106 = vmatpush2.bf16.msra.mxu0 0
    %107 = vmatprep.subr.bf16.mxu0 0
    %108 = vmatpush2.bf16.msra.mxu0 0
    %109 = vmatprep.subr.bf16.mxu0 0
    %110 = vmatpush2.bf16.msra.mxu0 0
    %111 = vmatprep.mubr.bf16.mxu0 0
    %112 = vmatmul.mubr.bf16.gmra.mxu0 %v77
    %v113 = vpop.f32.mrf.mxu0
    %v114 = vadd.f32 %v49, %v113
    %v115 = vpop.f32.mrf.mxu0
    %v116 = vpop.f32.mrf.mxu0
    %v117 = vadd.f32 %v49, %v116
    %v118 = vpop.f32.mrf.mxu0
    %119 = vdwg.mxu0
    %v120 = vmax.f32 %v114, 0.0
    %v121 = vmax.f32 %v117, 0.0
    %v122 = vpack.c.bf16 %v121, %v120
    %v123 = vld [vmem:[%s3] sm:$0xf]
    %v124 = vld [vmem:[%s3 + $0x4] sm:$0xf]
    %v125 = vld [vmem:[%s3 + $0x8] sm:$0xf]
    %v126 = vld [vmem:[%s3 + $0xc] sm:$0xf]
    %v127 = vld [vmem:[%s3 + $0x10] sm:$0xf]
    %v128 = vld [vmem:[%s3 + $0x14] sm:$0xf]
    %v129 = vld [vmem:[%s3 + $0x18] sm:$0xf]
    %v130 = vld [vmem:[%s3 + $0x1c] sm:$0xf]
    %v131 = vld [vmem:[%s3 + $0x20] sm:$0xf]
    %v132 = vld [vmem:[%s3 + $0x24] sm:$0xf]
    %v133 = vld [vmem:[%s3 + $0x28] sm:$0xf]
    %v134 = vld [vmem:[%s3 + $0x2c] sm:$0xf]
    %v135 = vld [vmem:[%s3 + $0x30] sm:$0xf]
    %v136 = vld [vmem:[%s3 + $0x34] sm:$0xf]
    %v137 = vld [vmem:[%s3 + $0x38] sm:$0xf]
    %v138 = vld [vmem:[%s3 + $0x3c] sm:$0xf]
    %v139 = vld [vmem:[%s4] sm:$0x1]
    %v141 = vlaneseq
    %v142 = vshrl.u32 %v141, 7
    %v143 = vsub.s32 0, %v142
    %v144 = vrot.slane %v139, %v143
    %v162 = vunpack.c.l.b16 %v123
    %v163 = vunpack.c.l.b16 %v124
    %v164 = vunpack.c.l.b16 %v125
    %v165 = vunpack.c.l.b16 %v126
    %v166 = vunpack.c.l.b16 %v127
    %v167 = vunpack.c.l.b16 %v128
    %v168 = vunpack.c.l.b16 %v129
    %v169 = vunpack.c.l.b16 %v130
    %v170 = vunpack.c.l.b16 %v131
    %v171 = vunpack.c.l.b16 %v132
    %v172 = vunpack.c.l.b16 %v133
    %v173 = vunpack.c.l.b16 %v134
    %v174 = vunpack.c.l.b16 %v135
    %v175 = vunpack.c.l.b16 %v136
    %v176 = vunpack.c.l.b16 %v137
    %v177 = vunpack.c.l.b16 %v138
    %v178 = vpack.c.b16 %v163, %v162
    %v179 = vpack.c.b16 %v165, %v164
    %v180 = vpack.c.b16 %v167, %v166
    %v181 = vpack.c.b16 %v169, %v168
    %v182 = vpack.c.b16 %v171, %v170
    %v183 = vpack.c.b16 %v173, %v172
    %v184 = vpack.c.b16 %v175, %v174
    %v185 = vpack.c.b16 %v177, %v176
    %194 = vmatprep.subr.bf16.mxu0 0
    %195 = vmatpush1.bf16.msra.mxu0 %v185
    %196 = vmatprep.subr.bf16.mxu0 0
    %197 = vmatpush1.bf16.msra.mxu0 %v184
    %198 = vmatprep.subr.bf16.mxu0 0
    %199 = vmatpush1.bf16.msra.mxu0 %v183
    %200 = vmatprep.subr.bf16.mxu0 0
    %201 = vmatpush1.bf16.msra.mxu0 %v182
    %202 = vmatprep.subr.bf16.mxu0 0
    %203 = vmatpush1.bf16.msra.mxu0 %v181
    %204 = vmatprep.subr.bf16.mxu0 0
    %205 = vmatpush1.bf16.msra.mxu0 %v180
    %206 = vmatprep.subr.bf16.mxu0 0
    %207 = vmatpush1.bf16.msra.mxu0 %v179
    %208 = vmatprep.subr.bf16.mxu0 0
    %209 = vmatpush1.bf16.msra.mxu0 %v178
    %210 = vmatprep.subr.bf16.mxu0 0
    %211 = vmatpush2.bf16.msra.mxu0 0
    %212 = vmatprep.subr.bf16.mxu0 0
    %213 = vmatpush2.bf16.msra.mxu0 0
    %214 = vmatprep.subr.bf16.mxu0 0
    %215 = vmatpush2.bf16.msra.mxu0 0
    %216 = vmatprep.subr.bf16.mxu0 0
    %217 = vmatpush2.bf16.msra.mxu0 0
    %218 = vmatprep.subr.bf16.mxu0 0
    %219 = vmatpush2.bf16.msra.mxu0 0
    %220 = vmatprep.subr.bf16.mxu0 0
    %221 = vmatpush2.bf16.msra.mxu0 0
    %222 = vmatprep.subr.bf16.mxu0 0
    %223 = vmatpush2.bf16.msra.mxu0 0
    %224 = vmatprep.subr.bf16.mxu0 0
    %225 = vmatpush2.bf16.msra.mxu0 0
    %226 = vmatprep.mubr.bf16.mxu0 0
    %227 = vmatmul.mubr.bf16.gmra.mxu0 %v122
    %v228 = vpop.f32.mrf.mxu0
    %v229 = vadd.f32 %v144, %v228
    %v230 = vpop.f32.mrf.mxu0
    %v231 = vpop.f32.mrf.mxu0
    %v232 = vadd.f32 %v144, %v231
    %v233 = vpop.f32.mrf.mxu0
    %234 = vdwg.mxu0
    %v235 = vmax.f32 %v229, 0.0
    %v236 = vmax.f32 %v232, 0.0
    %v237 = vpack.c.bf16 %v236, %v235
    %v238 = vld [vmem:[%s5] sm:$0xf]
    %v239 = vld [vmem:[%s5 + $0x4] sm:$0xf]
    %v240 = vld [vmem:[%s5 + $0x8] sm:$0xf]
    %v241 = vld [vmem:[%s5 + $0xc] sm:$0xf]
    %v242 = vld [vmem:[%s5 + $0x10] sm:$0xf]
    %v243 = vld [vmem:[%s5 + $0x14] sm:$0xf]
    %v244 = vld [vmem:[%s5 + $0x18] sm:$0xf]
    %v245 = vld [vmem:[%s5 + $0x1c] sm:$0xf]
    %v246 = vld [vmem:[%s5 + $0x20] sm:$0xf]
    %v247 = vld [vmem:[%s5 + $0x24] sm:$0xf]
    %v248 = vld [vmem:[%s5 + $0x28] sm:$0xf]
    %v249 = vld [vmem:[%s5 + $0x2c] sm:$0xf]
    %v250 = vld [vmem:[%s5 + $0x30] sm:$0xf]
    %v251 = vld [vmem:[%s5 + $0x34] sm:$0xf]
    %v252 = vld [vmem:[%s5 + $0x38] sm:$0xf]
    %v253 = vld [vmem:[%s5 + $0x3c] sm:$0xf]
    %v254 = vld [vmem:[%s6] sm:$0x1]
    %v256 = vlaneseq
    %v257 = vshrl.u32 %v256, 7
    %v258 = vsub.s32 0, %v257
    %v259 = vrot.slane %v254, %v258
    %v277 = vunpack.c.l.b16 %v238
    %v278 = vunpack.c.l.b16 %v239
    %v279 = vunpack.c.l.b16 %v240
    %v280 = vunpack.c.l.b16 %v241
    %v281 = vunpack.c.l.b16 %v242
    %v282 = vunpack.c.l.b16 %v243
    %v283 = vunpack.c.l.b16 %v244
    %v284 = vunpack.c.l.b16 %v245
    %v285 = vunpack.c.l.b16 %v246
    %v286 = vunpack.c.l.b16 %v247
    %v287 = vunpack.c.l.b16 %v248
    %v288 = vunpack.c.l.b16 %v249
    %v289 = vunpack.c.l.b16 %v250
    %v290 = vunpack.c.l.b16 %v251
    %v291 = vunpack.c.l.b16 %v252
    %v292 = vunpack.c.l.b16 %v253
    %v293 = vpack.c.b16 %v278, %v277
    %v294 = vpack.c.b16 %v280, %v279
    %v295 = vpack.c.b16 %v282, %v281
    %v296 = vpack.c.b16 %v284, %v283
    %v297 = vpack.c.b16 %v286, %v285
    %v298 = vpack.c.b16 %v288, %v287
    %v299 = vpack.c.b16 %v290, %v289
    %v300 = vpack.c.b16 %v292, %v291
    %309 = vmatprep.subr.bf16.mxu0 0
    %310 = vmatpush1.bf16.msra.mxu0 %v300
    %311 = vmatprep.subr.bf16.mxu0 0
    %312 = vmatpush1.bf16.msra.mxu0 %v299
    %313 = vmatprep.subr.bf16.mxu0 0
    %314 = vmatpush1.bf16.msra.mxu0 %v298
    %315 = vmatprep.subr.bf16.mxu0 0
    %316 = vmatpush1.bf16.msra.mxu0 %v297
    %317 = vmatprep.subr.bf16.mxu0 0
    %318 = vmatpush1.bf16.msra.mxu0 %v296
    %319 = vmatprep.subr.bf16.mxu0 0
    %320 = vmatpush1.bf16.msra.mxu0 %v295
    %321 = vmatprep.subr.bf16.mxu0 0
    %322 = vmatpush1.bf16.msra.mxu0 %v294
    %323 = vmatprep.subr.bf16.mxu0 0
    %324 = vmatpush1.bf16.msra.mxu0 %v293
    %325 = vmatprep.subr.bf16.mxu0 0
    %326 = vmatpush2.bf16.msra.mxu0 0
    %327 = vmatprep.subr.bf16.mxu0 0
    %328 = vmatpush2.bf16.msra.mxu0 0
    %329 = vmatprep.subr.bf16.mxu0 0
    %330 = vmatpush2.bf16.msra.mxu0 0
    %331 = vmatprep.subr.bf16.mxu0 0
    %332 = vmatpush2.bf16.msra.mxu0 0
    %333 = vmatprep.subr.bf16.mxu0 0
    %334 = vmatpush2.bf16.msra.mxu0 0
    %335 = vmatprep.subr.bf16.mxu0 0
    %336 = vmatpush2.bf16.msra.mxu0 0
    %337 = vmatprep.subr.bf16.mxu0 0
    %338 = vmatpush2.bf16.msra.mxu0 0
    %339 = vmatprep.subr.bf16.mxu0 0
    %340 = vmatpush2.bf16.msra.mxu0 0
    %341 = vmatprep.mubr.bf16.mxu0 0
    %342 = vmatmul.mubr.bf16.gmra.mxu0 %v237
    %v343 = vpop.f32.mrf.mxu0
    %v344 = vadd.f32 %v259, %v343
    %v345 = vpop.f32.mrf.mxu0
    %v346 = vpop.f32.mrf.mxu0
    %v347 = vadd.f32 %v259, %v346
    %v348 = vpop.f32.mrf.mxu0
    %349 = vdwg.mxu0
    %v350 = vadd.f32 %v344, 3.0
    %v351 = vadd.f32 %v347, 3.0
    %v352 = vmax.f32 %v350, 0.0
    %v353 = vmax.f32 %v351, 0.0
    %v354 = vmin.f32 %v352, 6.0
    %v355 = vmin.f32 %v353, 6.0
    %v356 = vmul.f32 %v344, %v354
    %v357 = vmul.f32 %v347, %v355
    %v358 = vmul.f32 %v356, 0.16666667
    %v359 = vmul.f32 %v357, 0.16666667
    %v360 = vpack.c.bf16 %v359, %v358
    %v361 = vld [vmem:[%s7] sm:$0xf]
    %v362 = vld [vmem:[%s7 + $0x4] sm:$0xf]
    %v363 = vld [vmem:[%s7 + $0x8] sm:$0xf]
    %v364 = vld [vmem:[%s7 + $0xc] sm:$0xf]
    %v365 = vld [vmem:[%s7 + $0x10] sm:$0xf]
    %v366 = vld [vmem:[%s7 + $0x14] sm:$0xf]
    %v367 = vld [vmem:[%s7 + $0x18] sm:$0xf]
    %v368 = vld [vmem:[%s7 + $0x1c] sm:$0xf]
    %v369 = vld [vmem:[%s7 + $0x20] sm:$0xf]
    %v370 = vld [vmem:[%s7 + $0x24] sm:$0xf]
    %v371 = vld [vmem:[%s7 + $0x28] sm:$0xf]
    %v372 = vld [vmem:[%s7 + $0x2c] sm:$0xf]
    %v373 = vld [vmem:[%s7 + $0x30] sm:$0xf]
    %v374 = vld [vmem:[%s7 + $0x34] sm:$0xf]
    %v375 = vld [vmem:[%s7 + $0x38] sm:$0xf]
    %v376 = vld [vmem:[%s7 + $0x3c] sm:$0xf]
    %v377 = vld [vmem:[%s8] sm:$0x1]
    %v379 = vlaneseq
    %v380 = vshrl.u32 %v379, 7
    %v381 = vsub.s32 0, %v380
    %v382 = vrot.slane %v377, %v381
    %v400 = vunpack.c.l.b16 %v361
    %v401 = vunpack.c.l.b16 %v362
    %v402 = vunpack.c.l.b16 %v363
    %v403 = vunpack.c.l.b16 %v364
    %v404 = vunpack.c.l.b16 %v365
    %v405 = vunpack.c.l.b16 %v366
    %v406 = vunpack.c.l.b16 %v367
    %v407 = vunpack.c.l.b16 %v368
    %v408 = vunpack.c.l.b16 %v369
    %v409 = vunpack.c.l.b16 %v370
    %v410 = vunpack.c.l.b16 %v371
    %v411 = vunpack.c.l.b16 %v372
    %v412 = vunpack.c.l.b16 %v373
    %v413 = vunpack.c.l.b16 %v374
    %v414 = vunpack.c.l.b16 %v375
    %v415 = vunpack.c.l.b16 %v376
    %v416 = vpack.c.b16 %v401, %v400
    %v417 = vpack.c.b16 %v403, %v402
    %v418 = vpack.c.b16 %v405, %v404
    %v419 = vpack.c.b16 %v407, %v406
    %v420 = vpack.c.b16 %v409, %v408
    %v421 = vpack.c.b16 %v411, %v410
    %v422 = vpack.c.b16 %v413, %v412
    %v423 = vpack.c.b16 %v415, %v414
    %432 = vmatprep.subr.bf16.mxu0 0
    %433 = vmatpush1.bf16.msra.mxu0 %v423
    %434 = vmatprep.subr.bf16.mxu0 0
    %435 = vmatpush1.bf16.msra.mxu0 %v422
    %436 = vmatprep.subr.bf16.mxu0 0
    %437 = vmatpush1.bf16.msra.mxu0 %v421
    %438 = vmatprep.subr.bf16.mxu0 0
    %439 = vmatpush1.bf16.msra.mxu0 %v420
    %440 = vmatprep.subr.bf16.mxu0 0
    %441 = vmatpush1.bf16.msra.mxu0 %v419
    %442 = vmatprep.subr.bf16.mxu0 0
    %443 = vmatpush1.bf16.msra.mxu0 %v418
    %444 = vmatprep.subr.bf16.mxu0 0
    %445 = vmatpush1.bf16.msra.mxu0 %v417
    %446 = vmatprep.subr.bf16.mxu0 0
    %447 = vmatpush1.bf16.msra.mxu0 %v416
    %448 = vmatprep.subr.bf16.mxu0 0
    %449 = vmatpush2.bf16.msra.mxu0 0
    %450 = vmatprep.subr.bf16.mxu0 0
    %451 = vmatpush2.bf16.msra.mxu0 0
    %452 = vmatprep.subr.bf16.mxu0 0
    %453 = vmatpush2.bf16.msra.mxu0 0
    %454 = vmatprep.subr.bf16.mxu0 0
    %455 = vmatpush2.bf16.msra.mxu0 0
    %456 = vmatprep.subr.bf16.mxu0 0
    %457 = vmatpush2.bf16.msra.mxu0 0
    %458 = vmatprep.subr.bf16.mxu0 0
    %459 = vmatpush2.bf16.msra.mxu0 0
    %460 = vmatprep.subr.bf16.mxu0 0
    %461 = vmatpush2.bf16.msra.mxu0 0
    %462 = vmatprep.subr.bf16.mxu0 0
    %463 = vmatpush2.bf16.msra.mxu0 0
    %464 = vmatprep.mubr.bf16.mxu0 0
    %465 = vmatmul.mubr.bf16.gmra.mxu0 %v360
    %v466 = vpop.f32.mrf.mxu0
    %v467 = vadd.f32 %v382, %v466
    %v468 = vpop.f32.mrf.mxu0
    %v469 = vpop.f32.mrf.mxu0
    %v470 = vadd.f32 %v382, %v469
    %v471 = vpop.f32.mrf.mxu0
    %472 = vdwg.mxu0
    %v473 = vtanh.pop %v467
    %v474 = vtanh.pop %v470
    %v475 = vpack.c.bf16 %v474, %v473
    %v477 = vcombine.high %v475, %v475
    %v479 = vunpack.c.l.s4 1966171168
    %v480 = vunpack.c.0.s8 %v479
    %v481 = vlaneseq
    %v482 = vshrl.u32 %v481, 7
    %v483 = vsub.s32 %v480, %v482
    %v484 = vrot.slane %v475, %v483
    %v486 = vunpack.c.l.s4 1966171168
    %v487 = vunpack.c.0.s8 %v486
    %v488 = vlaneseq
    %v489 = vshrl.u32 %v488, 7
    %v490 = vsub.s32 %v487, %v489
    %v491 = vrot.slane %v477, %v490
    %v492 = vcombine.high %v484, %v484
    %v493 = vcombine.high %v491, %v491
    %v495 = vunpack.c.l.s4 1966171168
    %v496 = vunpack.c.0.s8 %v495
    %v497 = vlaneseq
    %v498 = vshrl.u32 %v497, 7
    %v499 = vsub.s32 %v496, %v498
    %v500 = vrot.slane %v484, %v499
    %v502 = vunpack.c.l.s4 1966171168
    %v503 = vunpack.c.0.s8 %v502
    %v504 = vlaneseq
    %v505 = vshrl.u32 %v504, 7
    %v506 = vsub.s32 %v503, %v505
    %v507 = vrot.slane %v491, %v506
    %v509 = vunpack.c.l.s4 1966171168
    %v510 = vunpack.c.0.s8 %v509
    %v511 = vlaneseq
    %v512 = vshrl.u32 %v511, 7
    %v513 = vsub.s32 %v510, %v512
    %v514 = vrot.slane %v492, %v513
    %v516 = vunpack.c.l.s4 1966171168
    %v517 = vunpack.c.0.s8 %v516
    %v518 = vlaneseq
    %v519 = vshrl.u32 %v518, 7
    %v520 = vsub.s32 %v517, %v519
    %v521 = vrot.slane %v493, %v520
    %v522 = vcombine.high %v500, %v500
    %v523 = vcombine.high %v507, %v507
    %v524 = vcombine.high %v514, %v514
    %v525 = vcombine.high %v521, %v521
    %vm534 = vcmask 122880
    %535 = vst.msk [vmem:[#allocation2] sm:$0x1] %vm534, %v500
    %536 = vst.msk [vmem:[#allocation2 + $0x1] sm:$0x1] %vm534, %v514
    %537 = vst.msk [vmem:[#allocation2 + $0x2] sm:$0x1] %vm534, %v522
    %538 = vst.msk [vmem:[#allocation2 + $0x3] sm:$0x1] %vm534, %v524
    %539 = vst.msk [vmem:[#allocation2 + $0x4] sm:$0x1] %vm534, %v507
    %540 = vst.msk [vmem:[#allocation2 + $0x5] sm:$0x1] %vm534, %v521
    %541 = vst.msk [vmem:[#allocation2 + $0x6] sm:$0x1] %vm534, %v523
    %542 = vst.msk [vmem:[#allocation2 + $0x7] sm:$0x1] %vm534, %v525
    // Predicated region
    $region38: #{actor_ppo_forward.1} parent=1 // pred_check
      _
    $region39: #{actor_ppo_forward.1} parent=1 // pred_check_branch
      %544 = sbr.rel (0) target = $region41
    $region40: #{actor_ppo_forward.1} parent=1 // pred_region
      // Predicated region
      $region42: #{actor_ppo_forward.1} parent=40 // pred_check
        _
      $region43: #{actor_ppo_forward.1} parent=40 // pred_check_branch
        %546 = sbr.rel (0) target = $region45
      $region44: #{actor_ppo_forward.1} parent=40 // pred_region
        // Predicated region
        $region46: #{actor_ppo_forward.1} parent=44 // pred_check
          _
        $region47: #{actor_ppo_forward.1} parent=44 // pred_check_branch
          %548 = sbr.rel target = $region49
        $region48: #{actor_ppo_forward.1} parent=44 // pred_region
          // Predicated region
          $region61: #{actor_ppo_forward.1} parent=48 // pred_check
            _
          $region62: #{actor_ppo_forward.1} parent=48 // pred_check_branch
            %564 = sbr.rel (0) target = $region64
          $region63: #{actor_ppo_forward.1} parent=48 // pred_region
            %s566 = ssub.s32 2, 1
            loop: start=0, step=1, limit=1
            $region65: #{actor_ppo_forward.1} parent=63 // loop_pre_header
              _
            $region66: #{actor_ppo_forward.1} parent=63 // loop_header
              %s568 = sphi 0, %s572
              %p569 = scmp.ge.s32.totalorder %s568, 1
              %s573 = sphi [#allocation2], [#allocation2]
              %s574 = sphi %s9, %s9
            $region67: #{actor_ppo_forward.1} parent=63 // loop_header_branch
              %571 = sbr.rel (%p569) target = $region71
            $region68: #{actor_ppo_forward.1} parent=63 // loop_body
              %v575 = vld [vmem:[%s573] sm:%s566]
              %576 = vst [vmem:[%s574] sm:%s566] %v575
            $region69: #{actor_ppo_forward.1} parent=63 // loop_footer
              %s572 = sadd.s32 1, %s568
            $region70: #{actor_ppo_forward.1} parent=63 // loop_footer_branch
              %567 = sbr.rel target = $region66
            $region71: #{actor_ppo_forward.1} parent=63 // loop_exit
              _
          $region64: #{actor_ppo_forward.1} parent=48 // pred_fallthru
            _
        $region49: #{actor_ppo_forward.1} parent=44 // pred_fallthru
          _
        // Predicated region
        $region50: #{actor_ppo_forward.1} parent=44 // pred_check
          _
        $region51: #{actor_ppo_forward.1} parent=44 // pred_check_branch
          %550 = sbr.rel (0) target = $region53
        $region52: #{actor_ppo_forward.1} parent=44 // pred_region
          %s552 = ssub.s32 2, 1
          loop: start=0, step=1, limit=1
          $region54: #{actor_ppo_forward.1} parent=52 // loop_pre_header
            _
          $region55: #{actor_ppo_forward.1} parent=52 // loop_header
            %s554 = sphi 0, %s558
            %p555 = scmp.ge.s32.totalorder %s554, 1
            %s559 = sphi [#allocation2], [#allocation2]
            %s560 = sphi %s9, %s9
          $region56: #{actor_ppo_forward.1} parent=52 // loop_header_branch
            %557 = sbr.rel (%p555) target = $region60
          $region57: #{actor_ppo_forward.1} parent=52 // loop_body
            %v561 = vld [vmem:[%s559] sm:%s552]
            %562 = vst [vmem:[%s560] sm:%s552] %v561
          $region58: #{actor_ppo_forward.1} parent=52 // loop_footer
            %s558 = sadd.s32 1, %s554
          $region59: #{actor_ppo_forward.1} parent=52 // loop_footer_branch
            %553 = sbr.rel target = $region55
          $region60: #{actor_ppo_forward.1} parent=52 // loop_exit
            _
        $region53: #{actor_ppo_forward.1} parent=44 // pred_fallthru
          _
      $region45: #{actor_ppo_forward.1} parent=40 // pred_fallthru
        _
      %577 = vnop
    $region41: #{actor_ppo_forward.1} parent=1 // pred_fallthru
      _
    // Predicated region
    $region72: #{actor_ppo_forward.1} parent=1 // pred_check
      _
    $region73: #{actor_ppo_forward.1} parent=1 // pred_check_branch
      %579 = sbr.rel (0) target = $region75
    $region74: #{actor_ppo_forward.1} parent=1 // pred_region
      _
    $region75: #{actor_ppo_forward.1} parent=1 // pred_fallthru
      _

</llo_original>
